<compile_context>
chip_gen: v7x
topology: tpu7x:2x2x1
jax: 0.10.0
libtpu: 0.0.40
codegen_flags: <defaults>
</compile_context>

<pallas_src>
from collections import OrderedDict

import jax
import jax.numpy as jnp
from jax.experimental import pallas as pl
from jax.experimental.pallas import tpu as pltpu

VMEM = pl.BlockSpec(memory_space=pltpu.MemorySpace.VMEM)


def _round_up(x, m):
    return ((x + m - 1) // m) * m


def _tpu_vmem_bytes():
    try:
        return int(pltpu.get_tpu_info().vmem_capacity_bytes)
    except Exception:
        return 64 * 1024 * 1024  # conservative (v7x per-TC)


# Generation-specific budget: big tiles / 96 MiB on v5e/v6e (128 MiB physical VMEM),
# tight footprint on v7x (64 MiB per TensorCore).
if _tpu_vmem_bytes() >= 100 * 1024 * 1024:
    _VMEM_LIMIT = 96 * 1024 * 1024
    _SIMS_ROW_TILE = 512
else:
    _VMEM_LIMIT = 48 * 1024 * 1024
    _SIMS_ROW_TILE = 256


# ---------------------------------------------------------------------------
# Kernel 1: fused text branch (all modalities' GEU.fc + ContextGating + MoE softmax).
# BatchNorm1d uses training-mode batch statistics, so this kernel sees the whole batch
# in one block.
# TODO(synk): for production B*K, add an N grid with a two-pass BatchNorm (accumulate
# per-column sum/sumsq across row tiles with pl.when init/finalize) instead of
# per-block stats; a single block is correct but un-pipelined and VMEM-bound on v7x.
# ---------------------------------------------------------------------------
def _text_fused_kernel(x_ref, w1_ref, b1_ref, w2_ref, b2_ref, wm_ref, bm_ref,
                       te_ref, moe_ref):
    m_mods = wm_ref.shape[1]
    md = w1_ref.shape[1]
    d = md // m_mods

    xb = x_ref[...]                                     # bf16 text (pre-cast in wrapper)

    # GEU.fc for every modality in one lane-dense matmul: (N, Dt) @ (Dt, M*D), bf16 weights
    x1 = jnp.dot(xb, w1_ref[...], preferred_element_type=jnp.float32) + b1_ref[...]
    x1b = x1.astype(jnp.bfloat16)                       # halve the largest live buffer

    # ContextGating.fc for ALL modalities in one block-diagonal (M*D, M*D) matmul
    # (256-wide for M=2 -> fills the v6e/v7x MXU).
    # TODO(synk): for M > 3 pack modality PAIRS into (2D, 2D) blocks (block-diag waste
    # grows with M); on v5e a per-modality 128-wide loop already matches the MXU.
    g = jnp.dot(x1b, w2_ref[...], preferred_element_type=jnp.float32) + b2_ref[...]

    # BatchNorm1d (training mode): biased per-column batch stats, eps=1e-5, gamma=1, beta=0
    mean = jnp.mean(g, axis=0, keepdims=True)
    var = jnp.mean(jnp.square(g - mean), axis=0, keepdims=True)
    gate = jax.nn.sigmoid((g - mean) * jax.lax.rsqrt(var + 1e-5))   # F.glu gate

    # Per-modality: y = x1 * sigmoid(g), then F.normalize (rsqrt * multiply)
    for m in range(m_mods):
        lo = m * d
        ym = x1b[:, lo:lo + d].astype(jnp.float32) * gate[:, lo:lo + d]
        inv = jax.lax.rsqrt(jnp.maximum(jnp.sum(ym * ym, axis=1, keepdims=True), 1e-24))
        te_ref[:, lo:lo + d] = (ym * inv).astype(te_ref.dtype)

    # MoE weights: bf16 linear + f32 softmax over modalities (availability renorm removed:
    # softmax already sums to 1 when all modalities are present).
    logits = jnp.dot(xb, wm_ref[...], preferred_element_type=jnp.float32) + bm_ref[...]
    e = jnp.exp(logits - jnp.max(logits, axis=1, keepdims=True))
    moe_ref[...] = e * pl.reciprocal(jnp.sum(e, axis=1, keepdims=True), approx=True)


def text_branch(text_flat, tparams):
    n = text_flat.shape[0]
    md = tparams["w1"].shape[1]
    m_mods = tparams["wm"].shape[1]
    return pl.pallas_call(
        _text_fused_kernel,
        out_shape=(jax.ShapeDtypeStruct((n, md), jnp.bfloat16),
                   jax.ShapeDtypeStruct((n, m_mods), jnp.float32)),
        in_specs=[VMEM] * 7,
        out_specs=(VMEM, VMEM),
        compiler_params=pltpu.CompilerParams(vmem_limit_bytes=_VMEM_LIMIT),
    )(text_flat.astype(jnp.bfloat16), tparams["w1"], tparams["b1"],
      tparams["w2bd"], tparams["b2"], tparams["wm"], tparams["bm"])


# ---------------------------------------------------------------------------
# Kernel 2: video branch — one kernel per width group, grid over the group's modalities,
# each grid step writing its 128-lane slice of the (B, Mg*D) bf16 slab.
# ---------------------------------------------------------------------------
def _video_geu_kernel(x_ref, w1_ref, b1_ref, w2_ref, b2_ref, out_ref):
    x1 = jnp.dot(x_ref[...], w1_ref[...], preferred_element_type=jnp.float32) + b1_ref[...]
    g = jnp.dot(x1.astype(jnp.bfloat16), w2_ref[...],
                preferred_element_type=jnp.float32) + b2_ref[...]
    mean = jnp.mean(g, axis=0, keepdims=True)
    var = jnp.mean(jnp.square(g - mean), axis=0, keepdims=True)
    y = x1 * jax.nn.sigmoid((g - mean) * jax.lax.rsqrt(var + 1e-5))
    inv = jax.lax.rsqrt(jnp.maximum(jnp.sum(y * y, axis=1, keepdims=True), 1e-24))
    out_ref[...] = (y * inv).astype(out_ref.dtype)


def video_branch(experts_pad, vgroup):
    m_g, b, pad_in = experts_pad.shape
    d = vgroup["w1"].shape[-1]
    return pl.pallas_call(
        _video_geu_kernel,
        out_shape=jax.ShapeDtypeStruct((b, m_g * d), jnp.bfloat16),
        grid_spec=pltpu.PrefetchScalarGridSpec(
            num_scalar_prefetch=0,
            grid=(m_g,),
            in_specs=[
                pl.BlockSpec((None, b, pad_in), lambda m: (m, 0, 0)),
                pl.BlockSpec((None, pad_in, d), lambda m: (m, 0, 0)),
                pl.BlockSpec((None, 1, d), lambda m: (m, 0, 0)),
                pl.BlockSpec((None, d, d), lambda m: (m, 0, 0)),
                pl.BlockSpec((None, 1, d), lambda m: (m, 0, 0)),
            ],
            out_specs=pl.BlockSpec((b, d), lambda m: (0, m))),
        compiler_params=pltpu.CompilerParams(
            dimension_semantics=("parallel",),
            vmem_limit_bytes=_VMEM_LIMIT),
    )(experts_pad, vgroup["w1"], vgroup["b1"], vgroup["w2"], vgroup["b2"])


# ---------------------------------------------------------------------------
# Kernel 3: sharded cross-view inner product with l2renorm, one matmul per row tile.
#   Per-modality slices are unit-L2-normalized upstream, so
#     ||v_cat||   = sqrt(M)            (compile-time constant)
#     ||w ⊙ t_cat|| = sqrt(Σ_m w_m²)   (from the MoE weights only)
#   sims = (w ⊙ t_cat) · v_cat^T / (||w ⊙ t_cat|| · ||v_cat||)
#   -> one lane-dense bf16 dot_general with contraction depth M*D, norms applied after.
# ---------------------------------------------------------------------------
def _sims_kernel(te_ref, tw_ref, ve_ref, out_ref):
    m_mods = tw_ref.shape[1]
    d = ve_ref.shape[1] // m_mods
    tw = tw_ref[...]                                    # (tn, M) f32

    # Weighted text slab in bf16 (weight applied in f32, one cast per slice).
    parts = []
    for m in range(m_mods):
        lo = m * d
        parts.append((te_ref[:, lo:lo + d].astype(jnp.float32)
                      * tw[:, m:m + 1]).astype(jnp.bfloat16))
    tew = jnp.concatenate(parts, axis=1)                # (tn, M*D) bf16

    # Single matmul contracting the full M*D axis; video slab consumed as bf16 from ref.
    sims = jax.lax.dot_general(tew, ve_ref[...], (((1,), (1,)), ((), ())),
                               preferred_element_type=jnp.float32)   # (tn, b)

    inv_t = jax.lax.rsqrt(jnp.maximum(jnp.sum(tw * tw, axis=1, keepdims=True), 1e-24))
    inv_v = 1.0 / float(m_mods) ** 0.5
    out_ref[...] = sims * (inv_t * inv_v)


def cross_view_sims(te_cat, text_weights, ve_cat, *, row_tile=None):
    row_tile = row_tile or _SIMS_ROW_TILE
    n, md = te_cat.shape
    b = ve_cat.shape[0]
    m_mods = text_weights.shape[1]

    if n <= row_tile:
        tn, n_pad = n, n
    else:
        tn = row_tile
        n_pad = _round_up(n, tn)
        if n_pad != n:   # padded/masked tail tile instead of a divisibility assert
            te_cat = jnp.pad(te_cat, ((0, n_pad - n), (0, 0)))
            text_weights = jnp.pad(text_weights, ((0, n_pad - n), (0, 0)))

    # NOTE(v7x): n_pad // tn even gives a balanced split across the two TensorCores.
    out = pl.pallas_call(
        _sims_kernel,
        out_shape=jax.ShapeDtypeStruct((n_pad, b), jnp.float32),
        grid_spec=pltpu.PrefetchScalarGridSpec(
            num_scalar_prefetch=0,
            grid=(n_pad // tn,),
            in_specs=[pl.BlockSpec((tn, md), lambda i: (i, 0)),
                      pl.BlockSpec((tn, m_mods), lambda i: (i, 0)),
                      pl.BlockSpec((b, md), lambda i: (0, 0))],   # video stays resident
            out_specs=pl.BlockSpec((tn, b), lambda i: (i, 0))),
        compiler_params=pltpu.CompilerParams(
            dimension_semantics=("parallel",),
            vmem_limit_bytes=_VMEM_LIMIT),
    )(te_cat, text_weights, ve_cat)
    return out[:n] if n_pad != n else out


# ---------------------------------------------------------------------------
# Parameter construction (deterministic, synthetic), pre-fused & pre-cast for the kernels.
# ---------------------------------------------------------------------------
def _linear_params(key, d_in, d_out):
    k1, k2 = jax.random.split(key)
    w = jax.random.normal(k1, (d_in, d_out), jnp.float32) * (1.0 / jnp.sqrt(d_in))
    b = jax.random.normal(k2, (1, d_out), jnp.float32) * 0.05
    return w, b


def init_ce_module(key, expert_dims, text_dim):
    modalities = list(expert_dims.keys())
    m_mods = len(modalities)
    agg_dims = [expert_dims[m][1] for m in modalities]
    assert len(set(agg_dims)) == 1, "fused kernels assume a shared aggregation dim"
    d = agg_dims[0]

    keys = jax.random.split(key, 1 + 4 * m_mods)
    wm, bm = _linear_params(keys[0], text_dim, m_mods)

    t_w1, t_b1, t_w2, t_b2, vid = [], [], [], [], []
    for i, mod in enumerate(modalities):
        in_dim = expert_dims[mod][0]
        w1, b1 = _linear_params(keys[1 + 4 * i], text_dim, d)
        w2, b2 = _linear_params(keys[2 + 4 * i], d, d)
        t_w1.append(w1); t_b1.append(b1); t_w2.append(w2); t_b2.append(b2)
        w1v, b1v = _linear_params(keys[3 + 4 * i], in_dim, d)
        w2v, b2v = _linear_params(keys[4 + 4 * i], d, d)
        vid.append((mod, in_dim, w1v, b1v, w2v, b2v))

    # Block-diagonal ContextGating weight: one (M*D, M*D) matmul for all modalities.
    w2bd = jnp.zeros((m_mods * d, m_mods * d), jnp.float32)
    for i, w2 in enumerate(t_w2):
        w2bd = w2bd.at[i * d:(i + 1) * d, i * d:(i + 1) * d].set(w2)

    text = {
        "w1": jnp.concatenate(t_w1, axis=1).astype(jnp.bfloat16),   # (Dt, M*D) bf16
        "b1": jnp.concatenate(t_b1, axis=1),                        # (1, M*D) f32
        "w2bd": w2bd.astype(jnp.bfloat16),                          # (M*D, M*D) bf16
        "b2": jnp.concatenate(t_b2, axis=1),                        # (1, M*D) f32
        "wm": wm.astype(jnp.bfloat16), "bm": bm,                    # MoE linear
    }

    # Group video modalities by their 128-rounded input width (no global max_in padding).
    by_width = OrderedDict()
    for item in vid:
        pad_in = _round_up(item[1], 128)
        by_width.setdefault(pad_in, []).append(item)
    video_groups = []
    for pad_in, items in by_width.items():
        video_groups.append({
            "pad_in": pad_in,
            "modalities": [it[0] for it in items],
            "w1": jnp.stack([jnp.pad(it[2], ((0, pad_in - it[1]), (0, 0)))
                             for it in items], axis=0).astype(jnp.bfloat16),   # (Mg, pad_in, D)
            "b1": jnp.stack([it[3] for it in items], axis=0),                  # (Mg, 1, D)
            "w2": jnp.stack([it[4] for it in items], axis=0).astype(jnp.bfloat16),
            "b2": jnp.stack([it[5] for it in items], axis=0),
        })

    return {"text": text, "video_groups": video_groups, "d": d, "modalities": modalities}


# ---------------------------------------------------------------------------
# CEModule.forward (training mode, all modalities present)
# ---------------------------------------------------------------------------
def ce_module_forward(params, text, experts, modalities):
    B, K, Dt = text.shape
    d = params["d"]
    text_flat = text.reshape(B * K, Dt)

    # fused text_GU (all modalities) + MoE weights (drop_nans is a no-op: ind == 1)
    te_cat, moe_weights = text_branch(text_flat, params["text"])   # (B*K, M*D), (B*K, M)

    # fused video_GU per width group (bf16 inputs, padded only to a multiple of 128)
    group_outputs, slices = [], {}
    for grp in params["video_groups"]:
        pad_in = grp["pad_in"]
        experts_pad = jnp.stack(
            [jnp.pad(experts[m].astype(jnp.bfloat16),
                     ((0, 0), (0, pad_in - experts[m].shape[1])))
             for m in grp["modalities"]], axis=0)                  # (Mg, B, pad_in) bf16
        ve_grp = video_branch(experts_pad, grp)                    # (B, Mg*D) bf16
        group_outputs.append((grp["modalities"], ve_grp))
        for i, m in enumerate(grp["modalities"]):
            slices[m] = ve_grp[:, i * d:(i + 1) * d]
    if len(group_outputs) == 1 and group_outputs[0][0] == list(modalities):
        ve_cat = group_outputs[0][1]
    else:
        ve_cat = jnp.concatenate([slices[m] for m in modalities], axis=1)

    # sharded cross-view inner product (l2renorm=True)
    sims = cross_view_sims(te_cat, moe_weights, ve_cat)            # (B*K, B)

    # training mode -> merge_caption_similiarities == 'avg'
    if K > 1:
        sims = sims.reshape(B, K, B).mean(axis=1)
    return {"modalities": modalities, "cross_view_conf_matrix": sims}


# TODO(synk): data-dependent NaN validation / ipdb hooks in drop_nans and the verbose
# printing path have no Pallas equivalent and are omitted (ind == 1 everywhere).


# ---------------------------------------------------------------------------
# Pure-JAX f32 reference (same synthetic params) for a loose parity check.
# ---------------------------------------------------------------------------
def _reference_forward(params, text, experts, modalities):
    B, K, Dt = text.shape
    d = params["d"]
    m_mods = len(modalities)
    x = text.reshape(B * K, Dt)
    tp = params["text"]

    x1 = x @ tp["w1"].astype(jnp.float32) + tp["b1"]
    g = x1 @ tp["w2bd"].astype(jnp.float32) + tp["b2"]
    mean = g.mean(0, keepdims=True)
    var = ((g - mean) ** 2).mean(0, keepdims=True)
    y = x1 * jax.nn.sigmoid((g - mean) * jax.lax.rsqrt(var + 1e-5))
    te = []
    for m in range(m_mods):
        ym = y[:, m * d:(m + 1) * d]
        te.append(ym / jnp.maximum(jnp.linalg.norm(ym, axis=1, keepdims=True), 1e-12))
    logits = x @ tp["wm"].astype(jnp.float32) + tp["bm"]
    w = jax.nn.softmax(logits, axis=1)

    ve = {}
    for grp in params["video_groups"]:
        for i, mod in enumerate(grp["modalities"]):
            xin = experts[mod]
            w1v = grp["w1"][i].astype(jnp.float32)[:xin.shape[1]]
            x1v = xin @ w1v + grp["b1"][i]
            gv = x1v @ grp["w2"][i].astype(jnp.float32) + grp["b2"][i]
            mv = gv.mean(0, keepdims=True)
            vv = ((gv - mv) ** 2).mean(0, keepdims=True)
            yv = x1v * jax.nn.sigmoid((gv - mv) * jax.lax.rsqrt(vv + 1e-5))
            ve[mod] = yv / jnp.maximum(jnp.linalg.norm(yv, axis=1, keepdims=True), 1e-12)

    t_cat = jnp.concatenate([w[:, m:m + 1] * te[m] for m in range(m_mods)], axis=1)
    v_cat = jnp.concatenate([ve[mod] for mod in modalities], axis=1)
    t_cat = t_cat / jnp.maximum(jnp.linalg.norm(t_cat, axis=1, keepdims=True), 1e-12)
    v_cat = v_cat / jnp.maximum(jnp.linalg.norm(v_cat, axis=1, keepdims=True), 1e-12)
    sims = t_cat @ v_cat.T
    if K > 1:
        sims = sims.reshape(B, K, B).mean(axis=1)
    return sims


if __name__ == "__main__":
    # Small synthetic config: 2 modalities, B=4, K=2 captions/video, shared agg dim 128
    expert_dims = OrderedDict([("rgb", (48, 128)), ("flow", (40, 128))])
    text_dim = 128
    B, K = 4, 2
    modalities = list(expert_dims.keys())

    root = jax.random.PRNGKey(0)
    k_params, k_text, k_rgb, k_flow = jax.random.split(root, 4)

    params = init_ce_module(k_params, expert_dims, text_dim)
    text = jax.random.normal(k_text, (B, K, text_dim), jnp.float32)
    experts = {
        "rgb": jax.random.normal(k_rgb, (B, expert_dims["rgb"][0]), jnp.float32),
        "flow": jax.random.normal(k_flow, (B, expert_dims["flow"][0]), jnp.float32),
    }

    out = ce_module_forward(params, text, experts, modalities)
    conf = jax.block_until_ready(out["cross_view_conf_matrix"])
    assert conf.shape == (B, B)
    assert bool(jnp.all(jnp.isfinite(conf)))

    ref = _reference_forward(params, text, experts, modalities)
    err = float(jnp.max(jnp.abs(conf - ref)))
    assert err < 3e-2, f"max abs err vs f32 reference: {err}"
    print("KERNEL_OK")
</pallas_src>

<mosaic_0001>
module attributes {stable_mosaic.version = 11 : i64} {
  func.func @_text_fused_kernel(%arg0: memref<8x128xbf16, #tpu.memory_space<vmem>>, %arg1: memref<128x256xbf16, #tpu.memory_space<vmem>>, %arg2: memref<1x256xf32, #tpu.memory_space<vmem>>, %arg3: memref<256x256xbf16, #tpu.memory_space<vmem>>, %arg4: memref<1x256xf32, #tpu.memory_space<vmem>>, %arg5: memref<128x2xbf16, #tpu.memory_space<vmem>>, %arg6: memref<1x2xf32, #tpu.memory_space<vmem>>, %arg7: memref<8x256xbf16, #tpu.memory_space<vmem>>, %arg8: memref<8x2xf32, #tpu.memory_space<vmem>>) attributes {dimension_semantics = [], scalar_prefetch = 0 : i64, scratch_operands = 0 : i64, tpu.core_type = #tpu.core_type<tc>} {
    %c0 = arith.constant 0 : index
    %c0_0 = arith.constant 0 : index
    %0 = vector.load %arg0[%c0, %c0_0] : memref<8x128xbf16, #tpu.memory_space<vmem>>, vector<8x128xbf16>
    %c0_1 = arith.constant 0 : index
    %c0_2 = arith.constant 0 : index
    %1 = vector.load %arg1[%c0_1, %c0_2] : memref<128x256xbf16, #tpu.memory_space<vmem>>, vector<128x256xbf16>
    %cst = arith.constant dense<0.000000e+00> : vector<8x256xf32>
    %2 = tpu.matmul %0, %1, %cst {dimension_numbers = #tpu.dot_dimension_numbers<[1], [0], [0], [1], [0, 0, 1, 1], [], []>} : vector<8x128xbf16>, vector<128x256xbf16>, vector<8x256xf32> -> vector<8x256xf32>
    %c0_3 = arith.constant 0 : index
    %c0_4 = arith.constant 0 : index
    %3 = vector.load %arg2[%c0_3, %c0_4] : memref<1x256xf32, #tpu.memory_space<vmem>>, vector<1x256xf32>
    %4 = vector.broadcast %3 : vector<1x256xf32> to vector<8x256xf32>
    %5 = arith.addf %2, %4 : vector<8x256xf32>
    %6 = arith.truncf %5 : vector<8x256xf32> to vector<8x256xbf16>
    %c0_5 = arith.constant 0 : index
    %c0_6 = arith.constant 0 : index
    %7 = vector.load %arg3[%c0_5, %c0_6] : memref<256x256xbf16, #tpu.memory_space<vmem>>, vector<256x256xbf16>
    %cst_7 = arith.constant dense<0.000000e+00> : vector<8x256xf32>
    %8 = tpu.matmul %6, %7, %cst_7 {dimension_numbers = #tpu.dot_dimension_numbers<[1], [0], [0], [1], [0, 0, 1, 1], [], []>} : vector<8x256xbf16>, vector<256x256xbf16>, vector<8x256xf32> -> vector<8x256xf32>
    %c0_8 = arith.constant 0 : index
    %c0_9 = arith.constant 0 : index
    %9 = vector.load %arg4[%c0_8, %c0_9] : memref<1x256xf32, #tpu.memory_space<vmem>>, vector<1x256xf32>
    %10 = vector.broadcast %9 : vector<1x256xf32> to vector<8x256xf32>
    %11 = arith.addf %8, %10 : vector<8x256xf32>
    %cst_10 = arith.constant dense<0.000000e+00> : vector<256xf32>
    %12 = vector.multi_reduction <add>, %11, %cst_10 [0] : vector<8x256xf32> to vector<256xf32>
    %13 = vector.shape_cast %12 : vector<256xf32> to vector<1x256xf32>
    %cst_11 = arith.constant 8.000000e+00 : f32
    %14 = vector.broadcast %cst_11 : f32 to vector<1x256xf32>
    %15 = arith.divf %13, %14 : vector<1x256xf32>
    %16 = vector.broadcast %15 : vector<1x256xf32> to vector<8x256xf32>
    %17 = arith.subf %11, %16 : vector<8x256xf32>
    %18 = arith.mulf %17, %17 : vector<8x256xf32>
    %cst_12 = arith.constant dense<0.000000e+00> : vector<256xf32>
    %19 = vector.multi_reduction <add>, %18, %cst_12 [0] : vector<8x256xf32> to vector<256xf32>
    %20 = vector.shape_cast %19 : vector<256xf32> to vector<1x256xf32>
    %cst_13 = arith.constant 8.000000e+00 : f32
    %21 = vector.broadcast %cst_13 : f32 to vector<1x256xf32>
    %22 = arith.divf %20, %21 : vector<1x256xf32>
    %23 = vector.broadcast %15 : vector<1x256xf32> to vector<8x256xf32>
    %24 = arith.subf %11, %23 : vector<8x256xf32>
    %cst_14 = arith.constant 9.99999974E-6 : f32
    %25 = vector.broadcast %cst_14 : f32 to vector<1x256xf32>
    %26 = arith.addf %22, %25 : vector<1x256xf32>
    %27 = math.rsqrt %26 : vector<1x256xf32>
    %28 = vector.broadcast %27 : vector<1x256xf32> to vector<8x256xf32>
    %29 = arith.mulf %24, %28 : vector<8x256xf32>
    %30 = arith.negf %29 : vector<8x256xf32>
    %31 = math.exp %30 : vector<8x256xf32>
    %cst_15 = arith.constant 1.000000e+00 : f32
    %32 = vector.broadcast %cst_15 : f32 to vector<8x256xf32>
    %33 = arith.addf %32, %31 : vector<8x256xf32>
    %34 = arith.divf %32, %33 : vector<8x256xf32>
    %35 = vector.extract_strided_slice %6 {offsets = [0, 0], sizes = [8, 128], strides = [1, 1]} : vector<8x256xbf16> to vector<8x128xbf16>
    %36 = arith.extf %35 : vector<8x128xbf16> to vector<8x128xf32>
    %37 = vector.extract_strided_slice %34 {offsets = [0, 0], sizes = [8, 128], strides = [1, 1]} : vector<8x256xf32> to vector<8x128xf32>
    %38 = arith.mulf %36, %37 : vector<8x128xf32>
    %39 = arith.mulf %38, %38 : vector<8x128xf32>
    %cst_16 = arith.constant dense<0.000000e+00> : vector<8xf32>
    %40 = vector.multi_reduction <add>, %39, %cst_16 [1] : vector<8x128xf32> to vector<8xf32>
    %41 = vector.shape_cast %40 : vector<8xf32> to vector<8x1xf32>
    %cst_17 = arith.constant 1.000000e-24 : f32
    %42 = vector.broadcast %cst_17 : f32 to vector<8x1xf32>
    %43 = arith.maximumf %41, %42 : vector<8x1xf32>
    %44 = math.rsqrt %43 : vector<8x1xf32>
    %45 = vector.broadcast %44 : vector<8x1xf32> to vector<8x128xf32>
    %46 = arith.mulf %38, %45 : vector<8x128xf32>
    %47 = arith.truncf %46 : vector<8x128xf32> to vector<8x128xbf16>
    %c0_18 = arith.constant 0 : index
    %c0_19 = arith.constant 0 : index
    %48 = vector.load %arg7[%c0_18, %c0_19] : memref<8x256xbf16, #tpu.memory_space<vmem>>, vector<8x128xbf16>
    tpu.vector_store %arg7[%c0_18, %c0_19], %47 {strides = array<i32>} : memref<8x256xbf16, #tpu.memory_space<vmem>>, vector<8x128xbf16>,
    %49 = vector.extract_strided_slice %6 {offsets = [0, 128], sizes = [8, 128], strides = [1, 1]} : vector<8x256xbf16> to vector<8x128xbf16>
    %50 = arith.extf %49 : vector<8x128xbf16> to vector<8x128xf32>
    %51 = vector.extract_strided_slice %34 {offsets = [0, 128], sizes = [8, 128], strides = [1, 1]} : vector<8x256xf32> to vector<8x128xf32>
    %52 = arith.mulf %50, %51 : vector<8x128xf32>
    %53 = arith.mulf %52, %52 : vector<8x128xf32>
    %cst_20 = arith.constant dense<0.000000e+00> : vector<8xf32>
    %54 = vector.multi_reduction <add>, %53, %cst_20 [1] : vector<8x128xf32> to vector<8xf32>
    %55 = vector.shape_cast %54 : vector<8xf32> to vector<8x1xf32>
    %cst_21 = arith.constant 1.000000e-24 : f32
    %56 = vector.broadcast %cst_21 : f32 to vector<8x1xf32>
    %57 = arith.maximumf %55, %56 : vector<8x1xf32>
    %58 = math.rsqrt %57 : vector<8x1xf32>
    %59 = vector.broadcast %58 : vector<8x1xf32> to vector<8x128xf32>
    %60 = arith.mulf %52, %59 : vector<8x128xf32>
    %61 = arith.truncf %60 : vector<8x128xf32> to vector<8x128xbf16>
    %c0_22 = arith.constant 0 : index
    %c128 = arith.constant 128 : index
    %62 = vector.load %arg7[%c0_22, %c128] : memref<8x256xbf16, #tpu.memory_space<vmem>>, vector<8x128xbf16>
    tpu.vector_store %arg7[%c0_22, %c128], %61 {strides = array<i32>} : memref<8x256xbf16, #tpu.memory_space<vmem>>, vector<8x128xbf16>,
    %c0_23 = arith.constant 0 : index
    %c0_24 = arith.constant 0 : index
    %63 = vector.load %arg5[%c0_23, %c0_24] : memref<128x2xbf16, #tpu.memory_space<vmem>>, vector<128x2xbf16>
    %cst_25 = arith.constant dense<0.000000e+00> : vector<8x2xf32>
    %64 = tpu.matmul %0, %63, %cst_25 {dimension_numbers = #tpu.dot_dimension_numbers<[1], [0], [0], [1], [0, 0, 1, 1], [], []>} : vector<8x128xbf16>, vector<128x2xbf16>, vector<8x2xf32> -> vector<8x2xf32>
    %c0_26 = arith.constant 0 : index
    %c0_27 = arith.constant 0 : index
    %65 = vector.load %arg6[%c0_26, %c0_27] : memref<1x2xf32, #tpu.memory_space<vmem>>, vector<1x2xf32>
    %66 = vector.broadcast %65 : vector<1x2xf32> to vector<8x2xf32>
    %67 = arith.addf %64, %66 : vector<8x2xf32>
    %cst_28 = arith.constant dense<0xFF800000> : vector<8xf32>
    %68 = vector.multi_reduction <maximumf>, %67, %cst_28 [1] : vector<8x2xf32> to vector<8xf32>
    %69 = vector.shape_cast %68 : vector<8xf32> to vector<8x1xf32>
    %70 = vector.broadcast %69 : vector<8x1xf32> to vector<8x2xf32>
    %71 = arith.subf %67, %70 : vector<8x2xf32>
    %72 = math.exp %71 : vector<8x2xf32>
    %cst_29 = arith.constant dense<0.000000e+00> : vector<8xf32>
    %73 = vector.multi_reduction <add>, %72, %cst_29 [1] : vector<8x2xf32> to vector<8xf32>
    %74 = vector.shape_cast %73 : vector<8xf32> to vector<8x1xf32>
    %75 = tpu.reciprocal %74 {approx = true} : vector<8x1xf32> -> vector<8x1xf32>
    %76 = vector.broadcast %75 : vector<8x1xf32> to vector<8x2xf32>
    %77 = arith.mulf %72, %76 : vector<8x2xf32>
    %c0_30 = arith.constant 0 : index
    %c0_31 = arith.constant 0 : index
    %78 = vector.load %arg8[%c0_30, %c0_31] : memref<8x2xf32, #tpu.memory_space<vmem>>, vector<8x2xf32>
    tpu.vector_store %arg8[%c0_30, %c0_31], %77 {strides = array<i32>} : memref<8x2xf32, #tpu.memory_space<vmem>>, vector<8x2xf32>,
    return
  }
}

</mosaic_0001>

<llo_original>
// kernel: tpu_custom_call.1
$region0: #{tpu_custom_call.1}
  #allocation0 [shape = 'u32[]', space=smem, size = 0x4, offset = 0x4, fixed_abs, tag = 'smem constant byte address 0x4 - core index']
  #allocation1 [shape = 'u32[144,128]{1,0:T(1,128)}', space=vmem, size = 0x12000, scoped, tag = 'internal scratch']
  %s0 = inlined_call_operand.vmem [shape: bf16[8,128], index: 0, kind: input, shape index: {}]
  %s1 = inlined_call_operand.hbm [shape: bf16[128,256], index: 1, kind: input, shape index: {}]
  %s2 = inlined_call_operand.vmem [shape: f32[1,256], index: 2, kind: input, shape index: {}]
  %s3 = inlined_call_operand.hbm [shape: bf16[256,256], index: 3, kind: input, shape index: {}]
  %s4 = inlined_call_operand.vmem [shape: f32[1,256], index: 4, kind: input, shape index: {}]
  %s5 = inlined_call_operand.vmem [shape: bf16[128,2], index: 5, kind: input, shape index: {}]
  %s6 = inlined_call_operand.vmem [shape: f32[1,2], index: 6, kind: input, shape index: {}]
  %s7 = inlined_call_operand.hbm [shape: bf16[8,256], index: 7, kind: output, shape index: {0}]
  %s8 = inlined_call_operand.vmem [shape: f32[8,2], index: 8, kind: output, shape index: {1}]
  %9 = xla_tuple %s7, %s8
  %s10 = sld [smem:[#allocation0]]
  $region54: #{tpu_custom_call.1} parent=0
    _
  %s12 = ssub.s32 1, %s10
  %s13 = scalar_select 0, %s12, %s10
  $region1: #{tpu_custom_call.1} parent=0
    #allocation2 [shape = 'u8[65536]{0}', space=vmem, size = 0x10000, scoped, tag = 'input window, operand 1, single buffered']
    #allocation3 [shape = 's32[1]{0}', space=sflag, size = 0x4, scoped, tag = 'scoped memory for tpu_custom_call.1']
    #allocation4 [shape = 's32[1]{0}', space=sflag, size = 0x4, scoped, tag = 'scoped memory for tpu_custom_call.1']
    #allocation5 [shape = 'u8[131072]{0}', space=vmem, size = 0x20000, scoped, tag = 'input window, operand 3, single buffered']
    #allocation6 [shape = 's32[1]{0}', space=sflag, size = 0x4, scoped, tag = 'scoped memory for tpu_custom_call.1']
    #allocation7 [shape = 'u8[4096]{0}', space=vmem, size = 0x1000, scoped, tag = 'output window, operand 0, single buffered']
    %14 = vsyncpa [#allocation3], 0
    %15 = vsyncpa [#allocation6], 0
    %16 = vsyncpa [#allocation4], 0
    // Predicated region
    $region2: #{tpu_custom_call.1} parent=1 // pred_check
      _
    $region3: #{tpu_custom_call.1} parent=1 // pred_check_branch
      %18 = sbr.rel (0) target = $region5
    $region4: #{tpu_custom_call.1} parent=1 // pred_region
      _
    $region5: #{tpu_custom_call.1} parent=1 // pred_fallthru
      _
    // Predicated region
    $region6: #{tpu_custom_call.1} parent=1 // pred_check
      _
    $region7: #{tpu_custom_call.1} parent=1 // pred_check_branch
      %20 = sbr.rel (0) target = $region9
    $region8: #{tpu_custom_call.1} parent=1 // pred_region
      %s22 = ssub.s32 2048, 2048
      %23 = vsyncadd [#allocation3], %s22
      %s24 = sshll.u32 [#allocation2], 4
      %s25 = int_to_ptr.vmem [resolvable:$true] %s24
      %30 = dma.hbm_to_vmem [thread:$0]  %s1, 2048, %s25, [#allocation3], 128, 128, 8
    $region9: #{tpu_custom_call.1} parent=1 // pred_fallthru
      _
    // Predicated region
    $region10: #{tpu_custom_call.1} parent=1 // pred_check
      _
    $region11: #{tpu_custom_call.1} parent=1 // pred_check_branch
      %32 = sbr.rel (0) target = $region13
    $region12: #{tpu_custom_call.1} parent=1 // pred_region
      _
    $region13: #{tpu_custom_call.1} parent=1 // pred_fallthru
      _
    // Predicated region
    $region14: #{tpu_custom_call.1} parent=1 // pred_check
      _
    $region15: #{tpu_custom_call.1} parent=1 // pred_check_branch
      %34 = sbr.rel (0) target = $region17
    $region16: #{tpu_custom_call.1} parent=1 // pred_region
      %s36 = ssub.s32 4096, 4096
      %37 = vsyncadd [#allocation6], %s36
      %s38 = sshll.u32 [#allocation5], 4
      %s39 = int_to_ptr.vmem [resolvable:$true] %s38
      %44 = dma.hbm_to_vmem [thread:$0]  %s3, 4096, %s39, [#allocation6], 128, 128, 8
    $region17: #{tpu_custom_call.1} parent=1 // pred_fallthru
      _
    // Predicated region
    $region18: #{tpu_custom_call.1} parent=1 // pred_check
      _
    $region19: #{tpu_custom_call.1} parent=1 // pred_check_branch
      %46 = sbr.rel (0) target = $region21
    $region20: #{tpu_custom_call.1} parent=1 // pred_region
      _
    $region21: #{tpu_custom_call.1} parent=1 // pred_fallthru
      _
    // Predicated region
    $region22: #{tpu_custom_call.1} parent=1 // pred_check
      _
    $region23: #{tpu_custom_call.1} parent=1 // pred_check_branch
      %48 = sbr.rel (0) target = $region25
    $region24: #{tpu_custom_call.1} parent=1 // pred_region
      _
    $region25: #{tpu_custom_call.1} parent=1 // pred_fallthru
      _
    // Predicated region
    $region26: #{tpu_custom_call.1} parent=1 // pred_check
      _
    $region27: #{tpu_custom_call.1} parent=1 // pred_check_branch
      %50 = sbr.rel (0) target = $region29
    $region28: #{tpu_custom_call.1} parent=1 // pred_region
      _
    $region29: #{tpu_custom_call.1} parent=1 // pred_fallthru
      _
    // Predicated region
    $region30: #{tpu_custom_call.1} parent=1 // pred_check
      _
    $region31: #{tpu_custom_call.1} parent=1 // pred_check_branch
      %52 = sbr.rel (0) target = $region33
    $region32: #{tpu_custom_call.1} parent=1 // pred_region
      %53 = dma.done [#allocation3], 2048
    $region33: #{tpu_custom_call.1} parent=1 // pred_fallthru
      _
    // Predicated region
    $region34: #{tpu_custom_call.1} parent=1 // pred_check
      _
    $region35: #{tpu_custom_call.1} parent=1 // pred_check_branch
      %55 = sbr.rel (0) target = $region37
    $region36: #{tpu_custom_call.1} parent=1 // pred_region
      %56 = dma.done [#allocation6], 4096
    $region37: #{tpu_custom_call.1} parent=1 // pred_fallthru
      _
    %v58 = vld [vmem:[%s0] sm:$0xf]
    %v59 = vld [vmem:[#allocation2] sm:$0xff]
    %v60 = vld [vmem:[#allocation2 + $0x8] sm:$0xff]
    %v61 = vld [vmem:[#allocation2 + $0x10] sm:$0xff]
    %v62 = vld [vmem:[#allocation2 + $0x18] sm:$0xff]
    %v63 = vld [vmem:[#allocation2 + $0x20] sm:$0xff]
    %v64 = vld [vmem:[#allocation2 + $0x28] sm:$0xff]
    %v65 = vld [vmem:[#allocation2 + $0x30] sm:$0xff]
    %v66 = vld [vmem:[#allocation2 + $0x38] sm:$0xff]
    %v67 = vld [vmem:[#allocation2 + $0x40] sm:$0xff]
    %v68 = vld [vmem:[#allocation2 + $0x48] sm:$0xff]
    %v69 = vld [vmem:[#allocation2 + $0x50] sm:$0xff]
    %v70 = vld [vmem:[#allocation2 + $0x58] sm:$0xff]
    %v71 = vld [vmem:[#allocation2 + $0x60] sm:$0xff]
    %v72 = vld [vmem:[#allocation2 + $0x68] sm:$0xff]
    %v73 = vld [vmem:[#allocation2 + $0x70] sm:$0xff]
    %v74 = vld [vmem:[#allocation2 + $0x78] sm:$0xff]
    %v75 = vld [vmem:[%s2] sm:$0x3]
    %v77 = vlaneseq
    %v78 = vshrl.u32 %v77, 7
    %v79 = vsub.s32 0, %v78
    %v80 = vrot.slane %v75, %v79
    %v81 = vlaneseq
    %v82 = vshrl.u32 %v81, 7
    %v83 = vsub.s32 1, %v82
    %v84 = vrot.slane %v75, %v83
    %v103 = vunpack.c.l.b16 %v59
    %v104 = vunpack.c.h.b16 %v59
    %v105 = vunpack.c.l.b16 %v60
    %v106 = vunpack.c.h.b16 %v60
    %v107 = vunpack.c.l.b16 %v61
    %v108 = vunpack.c.h.b16 %v61
    %v109 = vunpack.c.l.b16 %v62
    %v110 = vunpack.c.h.b16 %v62
    %v111 = vunpack.c.l.b16 %v63
    %v112 = vunpack.c.h.b16 %v63
    %v113 = vunpack.c.l.b16 %v64
    %v114 = vunpack.c.h.b16 %v64
    %v115 = vunpack.c.l.b16 %v65
    %v116 = vunpack.c.h.b16 %v65
    %v117 = vunpack.c.l.b16 %v66
    %v118 = vunpack.c.h.b16 %v66
    %v119 = vunpack.c.l.b16 %v67
    %v120 = vunpack.c.h.b16 %v67
    %v121 = vunpack.c.l.b16 %v68
    %v122 = vunpack.c.h.b16 %v68
    %v123 = vunpack.c.l.b16 %v69
    %v124 = vunpack.c.h.b16 %v69
    %v125 = vunpack.c.l.b16 %v70
    %v126 = vunpack.c.h.b16 %v70
    %v127 = vunpack.c.l.b16 %v71
    %v128 = vunpack.c.h.b16 %v71
    %v129 = vunpack.c.l.b16 %v72
    %v130 = vunpack.c.h.b16 %v72
    %v131 = vunpack.c.l.b16 %v73
    %v132 = vunpack.c.h.b16 %v73
    %v133 = vunpack.c.l.b16 %v74
    %v134 = vunpack.c.h.b16 %v74
    %v135 = vpack.c.b16 %v105, %v103
    %v136 = vpack.c.b16 %v106, %v104
    %v137 = vpack.c.b16 %v109, %v107
    %v138 = vpack.c.b16 %v110, %v108
    %v139 = vpack.c.b16 %v113, %v111
    %v140 = vpack.c.b16 %v114, %v112
    %v141 = vpack.c.b16 %v117, %v115
    %v142 = vpack.c.b16 %v118, %v116
    %v143 = vpack.c.b16 %v121, %v119
    %v144 = vpack.c.b16 %v122, %v120
    %v145 = vpack.c.b16 %v125, %v123
    %v146 = vpack.c.b16 %v126, %v124
    %v147 = vpack.c.b16 %v129, %v127
    %v148 = vpack.c.b16 %v130, %v128
    %v149 = vpack.c.b16 %v133, %v131
    %v150 = vpack.c.b16 %v134, %v132
    %167 = vmatprep.subr.bf16.mxu0 %v136
    %168 = vmatpush1.bf16.msra.mxu0 %v135
    %169 = vmatprep.subr.bf16.mxu0 %v138
    %170 = vmatpush1.bf16.msra.mxu0 %v137
    %171 = vmatprep.subr.bf16.mxu0 %v140
    %172 = vmatpush1.bf16.msra.mxu0 %v139
    %173 = vmatprep.subr.bf16.mxu0 %v142
    %174 = vmatpush1.bf16.msra.mxu0 %v141
    %175 = vmatprep.subr.bf16.mxu0 %v144
    %176 = vmatpush1.bf16.msra.mxu0 %v143
    %177 = vmatprep.subr.bf16.mxu0 %v146
    %178 = vmatpush1.bf16.msra.mxu0 %v145
    %179 = vmatprep.subr.bf16.mxu0 %v148
    %180 = vmatpush1.bf16.msra.mxu0 %v147
    %181 = vmatprep.subr.bf16.mxu0 %v150
    %182 = vmatpush1.bf16.msra.mxu0 %v149
    %183 = vmatprep.subr.bf16.mxu0 0
    %184 = vmatpush1.bf16.msra.mxu0 0
    %185 = vmatprep.subr.bf16.mxu0 0
    %186 = vmatpush1.bf16.msra.mxu0 0
    %187 = vmatprep.subr.bf16.mxu0 0
    %188 = vmatpush1.bf16.msra.mxu0 0
    %189 = vmatprep.subr.bf16.mxu0 0
    %190 = vmatpush1.bf16.msra.mxu0 0
    %191 = vmatprep.subr.bf16.mxu0 0
    %192 = vmatpush1.bf16.msra.mxu0 0
    %193 = vmatprep.subr.bf16.mxu0 0
    %194 = vmatpush1.bf16.msra.mxu0 0
    %195 = vmatprep.subr.bf16.mxu0 0
    %196 = vmatpush1.bf16.msra.mxu0 0
    %197 = vmatprep.subr.bf16.mxu0 0
    %198 = vmatpush1.bf16.msra.mxu0 0
    %199 = vmatprep.mubr.bf16.mxu0 0
    %200 = vmatmul.mubr.bf16.gmra.mrb[0].mxu0 %v58
    %v201 = vpop.f32.mrb[0].mxu0
    %v202 = vadd.f32 %v80, %v201
    %v203 = vpop.f32.mrb[0].mxu0
    %v204 = vadd.f32 %v84, %v203
    %v205 = vpop.f32.mrb[0].mxu0
    %v206 = vpop.f32.mrb[0].mxu0
    %207 = vdwg.mxu0
    %v208 = vpack.c.bf16 %v202, %v202
    %v209 = vpack.c.bf16 %v204, %v204
    %v210 = vld [vmem:[#allocation5] sm:$0xff]
    %v211 = vld [vmem:[#allocation5 + $0x8] sm:$0xff]
    %v212 = vld [vmem:[#allocation5 + $0x10] sm:$0xff]
    %v213 = vld [vmem:[#allocation5 + $0x18] sm:$0xff]
    %v214 = vld [vmem:[#allocation5 + $0x20] sm:$0xff]
    %v215 = vld [vmem:[#allocation5 + $0x28] sm:$0xff]
    %v216 = vld [vmem:[#allocation5 + $0x30] sm:$0xff]
    %v217 = vld [vmem:[#allocation5 + $0x38] sm:$0xff]
    %v218 = vld [vmem:[#allocation5 + $0x40] sm:$0xff]
    %v219 = vld [vmem:[#allocation5 + $0x48] sm:$0xff]
    %v220 = vld [vmem:[#allocation5 + $0x50] sm:$0xff]
    %v221 = vld [vmem:[#allocation5 + $0x58] sm:$0xff]
    %v222 = vld [vmem:[#allocation5 + $0x60] sm:$0xff]
    %v223 = vld [vmem:[#allocation5 + $0x68] sm:$0xff]
    %v224 = vld [vmem:[#allocation5 + $0x70] sm:$0xff]
    %v225 = vld [vmem:[#allocation5 + $0x78] sm:$0xff]
    %v226 = vld [vmem:[#allocation5 + $0x80] sm:$0xff]
    %v227 = vld [vmem:[#allocation5 + $0x88] sm:$0xff]
    %v228 = vld [vmem:[#allocation5 + $0x90] sm:$0xff]
    %v229 = vld [vmem:[#allocation5 + $0x98] sm:$0xff]
    %v230 = vld [vmem:[#allocation5 + $0xa0] sm:$0xff]
    %v231 = vld [vmem:[#allocation5 + $0xa8] sm:$0xff]
    %v232 = vld [vmem:[#allocation5 + $0xb0] sm:$0xff]
    %v233 = vld [vmem:[#allocation5 + $0xb8] sm:$0xff]
    %v234 = vld [vmem:[#allocation5 + $0xc0] sm:$0xff]
    %v235 = vld [vmem:[#allocation5 + $0xc8] sm:$0xff]
    %v236 = vld [vmem:[#allocation5 + $0xd0] sm:$0xff]
    %v237 = vld [vmem:[#allocation5 + $0xd8] sm:$0xff]
    %v238 = vld [vmem:[#allocation5 + $0xe0] sm:$0xff]
    %v239 = vld [vmem:[#allocation5 + $0xe8] sm:$0xff]
    %v240 = vld [vmem:[#allocation5 + $0xf0] sm:$0xff]
    %v241 = vld [vmem:[#allocation5 + $0xf8] sm:$0xff]
    %v242 = vld [vmem:[%s4] sm:$0x3]
    %v244 = vlaneseq
    %v245 = vshrl.u32 %v244, 7
    %v246 = vsub.s32 0, %v245
    %v247 = vrot.slane %v242, %v246
    %v248 = vlaneseq
    %v249 = vshrl.u32 %v248, 7
    %v250 = vsub.s32 1, %v249
    %v251 = vrot.slane %v242, %v250
    %v286 = vunpack.c.l.b16 %v210
    %v287 = vunpack.c.h.b16 %v210
    %v288 = vunpack.c.l.b16 %v211
    %v289 = vunpack.c.h.b16 %v211
    %v290 = vunpack.c.l.b16 %v212
    %v291 = vunpack.c.h.b16 %v212
    %v292 = vunpack.c.l.b16 %v213
    %v293 = vunpack.c.h.b16 %v213
    %v294 = vunpack.c.l.b16 %v214
    %v295 = vunpack.c.h.b16 %v214
    %v296 = vunpack.c.l.b16 %v215
    %v297 = vunpack.c.h.b16 %v215
    %v298 = vunpack.c.l.b16 %v216
    %v299 = vunpack.c.h.b16 %v216
    %v300 = vunpack.c.l.b16 %v217
    %v301 = vunpack.c.h.b16 %v217
    %v302 = vunpack.c.l.b16 %v218
    %v303 = vunpack.c.h.b16 %v218
    %v304 = vunpack.c.l.b16 %v219
    %v305 = vunpack.c.h.b16 %v219
    %v306 = vunpack.c.l.b16 %v220
    %v307 = vunpack.c.h.b16 %v220
    %v308 = vunpack.c.l.b16 %v221
    %v309 = vunpack.c.h.b16 %v221
    %v310 = vunpack.c.l.b16 %v222
    %v311 = vunpack.c.h.b16 %v222
    %v312 = vunpack.c.l.b16 %v223
    %v313 = vunpack.c.h.b16 %v223
    %v314 = vunpack.c.l.b16 %v224
    %v315 = vunpack.c.h.b16 %v224
    %v316 = vunpack.c.l.b16 %v225
    %v317 = vunpack.c.h.b16 %v225
    %v318 = vunpack.c.l.b16 %v226
    %v319 = vunpack.c.h.b16 %v226
    %v320 = vunpack.c.l.b16 %v227
    %v321 = vunpack.c.h.b16 %v227
    %v322 = vunpack.c.l.b16 %v228
    %v323 = vunpack.c.h.b16 %v228
    %v324 = vunpack.c.l.b16 %v229
    %v325 = vunpack.c.h.b16 %v229
    %v326 = vunpack.c.l.b16 %v230
    %v327 = vunpack.c.h.b16 %v230
    %v328 = vunpack.c.l.b16 %v231
    %v329 = vunpack.c.h.b16 %v231
    %v330 = vunpack.c.l.b16 %v232
    %v331 = vunpack.c.h.b16 %v232
    %v332 = vunpack.c.l.b16 %v233
    %v333 = vunpack.c.h.b16 %v233
    %v334 = vunpack.c.l.b16 %v234
    %v335 = vunpack.c.h.b16 %v234
    %v336 = vunpack.c.l.b16 %v235
    %v337 = vunpack.c.h.b16 %v235
    %v338 = vunpack.c.l.b16 %v236
    %v339 = vunpack.c.h.b16 %v236
    %v340 = vunpack.c.l.b16 %v237
    %v341 = vunpack.c.h.b16 %v237
    %v342 = vunpack.c.l.b16 %v238
    %v343 = vunpack.c.h.b16 %v238
    %v344 = vunpack.c.l.b16 %v239
    %v345 = vunpack.c.h.b16 %v239
    %v346 = vunpack.c.l.b16 %v240
    %v347 = vunpack.c.h.b16 %v240
    %v348 = vunpack.c.l.b16 %v241
    %v349 = vunpack.c.h.b16 %v241
    %v350 = vpack.c.b16 %v288, %v286
    %v351 = vpack.c.b16 %v289, %v287
    %v352 = vpack.c.b16 %v292, %v290
    %v353 = vpack.c.b16 %v293, %v291
    %v354 = vpack.c.b16 %v296, %v294
    %v355 = vpack.c.b16 %v297, %v295
    %v356 = vpack.c.b16 %v300, %v298
    %v357 = vpack.c.b16 %v301, %v299
    %v358 = vpack.c.b16 %v304, %v302
    %v359 = vpack.c.b16 %v305, %v303
    %v360 = vpack.c.b16 %v308, %v306
    %v361 = vpack.c.b16 %v309, %v307
    %v362 = vpack.c.b16 %v312, %v310
    %v363 = vpack.c.b16 %v313, %v311
    %v364 = vpack.c.b16 %v316, %v314
    %v365 = vpack.c.b16 %v317, %v315
    %v366 = vpack.c.b16 %v320, %v318
    %v367 = vpack.c.b16 %v321, %v319
    %v368 = vpack.c.b16 %v324, %v322
    %v369 = vpack.c.b16 %v325, %v323
    %v370 = vpack.c.b16 %v328, %v326
    %v371 = vpack.c.b16 %v329, %v327
    %v372 = vpack.c.b16 %v332, %v330
    %v373 = vpack.c.b16 %v333, %v331
    %v374 = vpack.c.b16 %v336, %v334
    %v375 = vpack.c.b16 %v337, %v335
    %v376 = vpack.c.b16 %v340, %v338
    %v377 = vpack.c.b16 %v341, %v339
    %v378 = vpack.c.b16 %v344, %v342
    %v379 = vpack.c.b16 %v345, %v343
    %v380 = vpack.c.b16 %v348, %v346
    %v381 = vpack.c.b16 %v349, %v347
    %414 = vmatprep.subr.bf16.mxu0 %v351
    %415 = vmatpush1.bf16.msra.mxu0 %v350
    %416 = vmatprep.subr.bf16.mxu0 %v353
    %417 = vmatpush1.bf16.msra.mxu0 %v352
    %418 = vmatprep.subr.bf16.mxu0 %v355
    %419 = vmatpush1.bf16.msra.mxu0 %v354
    %420 = vmatprep.subr.bf16.mxu0 %v357
    %421 = vmatpush1.bf16.msra.mxu0 %v356
    %422 = vmatprep.subr.bf16.mxu0 %v359
    %423 = vmatpush1.bf16.msra.mxu0 %v358
    %424 = vmatprep.subr.bf16.mxu0 %v361
    %425 = vmatpush1.bf16.msra.mxu0 %v360
    %426 = vmatprep.subr.bf16.mxu0 %v363
    %427 = vmatpush1.bf16.msra.mxu0 %v362
    %428 = vmatprep.subr.bf16.mxu0 %v365
    %429 = vmatpush1.bf16.msra.mxu0 %v364
    %430 = vmatprep.subr.bf16.mxu0 %v367
    %431 = vmatpush1.bf16.msra.mxu0 %v366
    %432 = vmatprep.subr.bf16.mxu0 %v369
    %433 = vmatpush1.bf16.msra.mxu0 %v368
    %434 = vmatprep.subr.bf16.mxu0 %v371
    %435 = vmatpush1.bf16.msra.mxu0 %v370
    %436 = vmatprep.subr.bf16.mxu0 %v373
    %437 = vmatpush1.bf16.msra.mxu0 %v372
    %438 = vmatprep.subr.bf16.mxu0 %v375
    %439 = vmatpush1.bf16.msra.mxu0 %v374
    %440 = vmatprep.subr.bf16.mxu0 %v377
    %441 = vmatpush1.bf16.msra.mxu0 %v376
    %442 = vmatprep.subr.bf16.mxu0 %v379
    %443 = vmatpush1.bf16.msra.mxu0 %v378
    %444 = vmatprep.subr.bf16.mxu0 %v381
    %445 = vmatpush1.bf16.msra.mxu0 %v380
    %446 = vmatprep.mubr.bf16.mxu0 %v209
    %447 = vmatmul.mubr.bf16.gmra.mrb[0].mxu0 %v208
    %v448 = vpop.f32.mrb[0].mxu0
    %v449 = vadd.f32 %v247, %v448
    %v450 = vpop.f32.mrb[0].mxu0
    %v451 = vadd.f32 %v251, %v450
    %v452 = vpop.f32.mrb[0].mxu0
    %v453 = vpop.f32.mrb[0].mxu0
    %454 = vdwg.mxu0
    %v455 = vrot.slane %v449, 4
    %v456 = vadd.f32 %v449, %v455
    %v457 = vrot.slane %v456, 2
    %v458 = vadd.f32 %v456, %v457
    %v459 = vrot.slane %v458, 1
    %v460 = vadd.f32 %v458, %v459
    %v461 = vrot.slane %v451, 4
    %v462 = vadd.f32 %v451, %v461
    %v463 = vrot.slane %v462, 2
    %v464 = vadd.f32 %v462, %v463
    %v465 = vrot.slane %v464, 1
    %v466 = vadd.f32 %v464, %v465
    %v467 = vrcp.pop 8.0
    %v468 = vmul.f32 %v460, %v467
    %v469 = vmul.f32 %v466, %v467
    %v470 = vsub.f32 %v449, %v468
    %v471 = vsub.f32 %v451, %v469
    %v472 = vmul.f32 %v470, %v470
    %v473 = vmul.f32 %v471, %v471
    %v474 = vrot.slane %v472, 4
    %v475 = vadd.f32 %v472, %v474
    %v476 = vrot.slane %v475, 2
    %v477 = vadd.f32 %v475, %v476
    %v478 = vrot.slane %v477, 1
    %v479 = vadd.f32 %v477, %v478
    %v480 = vrot.slane %v473, 4
    %v481 = vadd.f32 %v473, %v480
    %v482 = vrot.slane %v481, 2
    %v483 = vadd.f32 %v481, %v482
    %v484 = vrot.slane %v483, 1
    %v485 = vadd.f32 %v483, %v484
    %v486 = vmul.f32 %v479, %v467
    %v487 = vmul.f32 %v485, %v467
    %v488 = vadd.f32 %v486, 1e-05
    %v489 = vadd.f32 %v487, 1e-05
    %v490 = vrsqrt.pop %v488
    %v491 = vrsqrt.pop %v489
    %v492 = vmul.f32 %v470, %v490
    %v493 = vmul.f32 %v471, %v491
    %v494 = vxor.u32 %v492, 2147483648
    %v495 = vxor.u32 %v493, 2147483648
    %v496 = vmul.f32 %v494, 1.442695
    %v497 = vpow.pop %v496
    %v498 = vmul.f32 %v495, 1.442695
    %v499 = vpow.pop %v498
    %v500 = vadd.f32 %v497, 1.0
    %v501 = vadd.f32 %v499, 1.0
    %v502 = vrcp.pop %v500
    %v503 = vmul.f32 1.0, %v502
    %v504 = vrcp.pop %v501
    %v505 = vmul.f32 1.0, %v504
    %v506 = vunpack.c.l.bf16 %v208
    %v507 = vmul.f32 %v506, %v503
    %v508 = vmul.f32 %v507, %v507
    %509 = vadd.xlane.f32.xlu0 %v508
    %v510 = vpop.xlane.xlu0 %509
    %v511 = vmax.f32 %v510, 1e-24
    %v512 = vrsqrt.pop %v511
    %v513 = vmul.f32 %v507, %v512
    %v514 = vpack.c.bf16 %v513, %v513
    %515 = vst [vmem:[#allocation7] sm:$0xf] %v514
    %v516 = vunpack.c.l.bf16 %v209
    %v517 = vmul.f32 %v516, %v505
    %v518 = vmul.f32 %v517, %v517
    %519 = vadd.xlane.f32.xlu0 %v518
    %v520 = vpop.xlane.xlu0 %519
    %v521 = vmax.f32 %v520, 1e-24
    %v522 = vrsqrt.pop %v521
    %v523 = vmul.f32 %v517, %v522
    %v524 = vpack.c.bf16 %v523, %v523
    %525 = vst [vmem:[#allocation7 + $0x4] sm:$0xf] %v524
    %v526 = vld [vmem:[%s5] sm:$0xf]
    %v527 = vld [vmem:[%s5 + $0x4] sm:$0xf]
    %v528 = vld [vmem:[%s5 + $0x8] sm:$0xf]
    %v529 = vld [vmem:[%s5 + $0xc] sm:$0xf]
    %v530 = vld [vmem:[%s5 + $0x10] sm:$0xf]
    %v531 = vld [vmem:[%s5 + $0x14] sm:$0xf]
    %v532 = vld [vmem:[%s5 + $0x18] sm:$0xf]
    %v533 = vld [vmem:[%s5 + $0x1c] sm:$0xf]
    %v534 = vld [vmem:[%s5 + $0x20] sm:$0xf]
    %v535 = vld [vmem:[%s5 + $0x24] sm:$0xf]
    %v536 = vld [vmem:[%s5 + $0x28] sm:$0xf]
    %v537 = vld [vmem:[%s5 + $0x2c] sm:$0xf]
    %v538 = vld [vmem:[%s5 + $0x30] sm:$0xf]
    %v539 = vld [vmem:[%s5 + $0x34] sm:$0xf]
    %v540 = vld [vmem:[%s5 + $0x38] sm:$0xf]
    %v541 = vld [vmem:[%s5 + $0x3c] sm:$0xf]
    %v542 = vld [vmem:[%s6] sm:$0x1]
    %v544 = vlaneseq
    %v545 = vshrl.u32 %v544, 7
    %v546 = vsub.s32 0, %v545
    %v547 = vrot.slane %v542, %v546
    %v565 = vunpack.c.l.b16 %v526
    %v566 = vunpack.c.l.b16 %v527
    %v567 = vunpack.c.l.b16 %v528
    %v568 = vunpack.c.l.b16 %v529
    %v569 = vunpack.c.l.b16 %v530
    %v570 = vunpack.c.l.b16 %v531
    %v571 = vunpack.c.l.b16 %v532
    %v572 = vunpack.c.l.b16 %v533
    %v573 = vunpack.c.l.b16 %v534
    %v574 = vunpack.c.l.b16 %v535
    %v575 = vunpack.c.l.b16 %v536
    %v576 = vunpack.c.l.b16 %v537
    %v577 = vunpack.c.l.b16 %v538
    %v578 = vunpack.c.l.b16 %v539
    %v579 = vunpack.c.l.b16 %v540
    %v580 = vunpack.c.l.b16 %v541
    %v581 = vpack.c.b16 %v566, %v565
    %v582 = vpack.c.b16 %v568, %v567
    %v583 = vpack.c.b16 %v570, %v569
    %v584 = vpack.c.b16 %v572, %v571
    %v585 = vpack.c.b16 %v574, %v573
    %v586 = vpack.c.b16 %v576, %v575
    %v587 = vpack.c.b16 %v578, %v577
    %v588 = vpack.c.b16 %v580, %v579
    %597 = vmatprep.subr.bf16.mxu0 0
    %598 = vmatpush1.bf16.msra.mxu0 %v581
    %599 = vmatprep.subr.bf16.mxu0 0
    %600 = vmatpush1.bf16.msra.mxu0 %v582
    %601 = vmatprep.subr.bf16.mxu0 0
    %602 = vmatpush1.bf16.msra.mxu0 %v583
    %603 = vmatprep.subr.bf16.mxu0 0
    %604 = vmatpush1.bf16.msra.mxu0 %v584
    %605 = vmatprep.subr.bf16.mxu0 0
    %606 = vmatpush1.bf16.msra.mxu0 %v585
    %607 = vmatprep.subr.bf16.mxu0 0
    %608 = vmatpush1.bf16.msra.mxu0 %v586
    %609 = vmatprep.subr.bf16.mxu0 0
    %610 = vmatpush1.bf16.msra.mxu0 %v587
    %611 = vmatprep.subr.bf16.mxu0 0
    %612 = vmatpush1.bf16.msra.mxu0 %v588
    %613 = vmatprep.subr.bf16.mxu0 0
    %614 = vmatpush1.bf16.msra.mxu0 0
    %615 = vmatprep.subr.bf16.mxu0 0
    %616 = vmatpush1.bf16.msra.mxu0 0
    %617 = vmatprep.subr.bf16.mxu0 0
    %618 = vmatpush1.bf16.msra.mxu0 0
    %619 = vmatprep.subr.bf16.mxu0 0
    %620 = vmatpush1.bf16.msra.mxu0 0
    %621 = vmatprep.subr.bf16.mxu0 0
    %622 = vmatpush1.bf16.msra.mxu0 0
    %623 = vmatprep.subr.bf16.mxu0 0
    %624 = vmatpush1.bf16.msra.mxu0 0
    %625 = vmatprep.subr.bf16.mxu0 0
    %626 = vmatpush1.bf16.msra.mxu0 0
    %627 = vmatprep.subr.bf16.mxu0 0
    %628 = vmatpush1.bf16.msra.mxu0 0
    %629 = vmatprep.mubr.bf16.mxu0 0
    %630 = vmatmul.mubr.bf16.gmra.mrb[0].mxu0 %v58
    %v631 = vpop.f32.mrb[0].mxu0
    %v632 = vadd.f32 %v547, %v631
    %v633 = vpop.f32.mrb[0].mxu0
    %v634 = vpop.f32.mrb[0].mxu0
    %v635 = vpop.f32.mrb[0].mxu0
    %636 = vdwg.mxu0
    %vm637 = vcmask 15360
    %v638 = vsel %vm637, %v632, -inf
    %639 = vmax.xlane.f32.xlu0 %v638
    %v640 = vpop.xlane.xlu0 %639
    %v641 = vsub.f32 %v632, %v640
    %v642 = vmul.f32 %v641, 1.442695
    %v643 = vpow.pop %v642
    %v644 = vsel %vm637, %v643, 0.0
    %645 = vadd.xlane.f32.xlu0 %v644
    %v646 = vpop.xlane.xlu0 %645
    %v647 = vrcp.pop %v646
    %v648 = vmul.f32 %v643, %v647
    %649 = vst.msk [vmem:[%s8] sm:$0xff] %vm637, %v648
    // Predicated region
    $region38: #{tpu_custom_call.1} parent=1 // pred_check
      _
    $region39: #{tpu_custom_call.1} parent=1 // pred_check_branch
      %651 = sbr.rel (0) target = $region41
    $region40: #{tpu_custom_call.1} parent=1 // pred_region
      %s653 = ssub.s32 128, 128
      %654 = vsyncadd [#allocation4], %s653
      %s656 = sshll.u32 [#allocation7], 4
      %s657 = int_to_ptr.vmem [resolvable:$true] %s656
      %659 = dma.vmem_to_hbm [thread:$0]  %s657, 128, %s7, [#allocation4]
    $region41: #{tpu_custom_call.1} parent=1 // pred_fallthru
      _
    // Predicated region
    $region42: #{tpu_custom_call.1} parent=1 // pred_check
      _
    $region43: #{tpu_custom_call.1} parent=1 // pred_check_branch
      %661 = sbr.rel (0) target = $region45
    $region44: #{tpu_custom_call.1} parent=1 // pred_region
      _
    $region45: #{tpu_custom_call.1} parent=1 // pred_fallthru
      _
    // Predicated region
    $region46: #{tpu_custom_call.1} parent=1 // pred_check
      _
    $region47: #{tpu_custom_call.1} parent=1 // pred_check_branch
      %663 = sbr.rel (0) target = $region49
    $region48: #{tpu_custom_call.1} parent=1 // pred_region
      %664 = dma.done [#allocation4], 128
    $region49: #{tpu_custom_call.1} parent=1 // pred_fallthru
      _
    // Predicated region
    $region50: #{tpu_custom_call.1} parent=1 // pred_check
      _
    $region51: #{tpu_custom_call.1} parent=1 // pred_check_branch
      %666 = sbr.rel (0) target = $region53
    $region52: #{tpu_custom_call.1} parent=1 // pred_region
      _
    $region53: #{tpu_custom_call.1} parent=1 // pred_fallthru
      _
    %667 = vsyncpa [#allocation3], 1
    %668 = vsyncpa [#allocation6], 1
    %669 = vsyncpa [#allocation4], 1

</llo_original>
